<compile_context>
chip_gen: v7x
topology: tpu7x:2x2x1
jax: 0.10.0
libtpu: 0.0.40
codegen_flags: <defaults>
</compile_context>

<pallas_src>
import functools

import jax
import jax.numpy as jnp
import numpy as np
from jax import lax
from jax.experimental import pallas as pl
from jax.experimental.pallas import tpu as pltpu


def _round_up(v, m):
    return ((v + m - 1) // m) * m


# ---------------------------------------------------------------------------
# Pallas kernel: one block of `nb` images per grid step.
#   conv1 (3x3, stride, BN1-scale folded) + bias + ReLU   -> one banded matmul
#   conv2 (3x3, 1, BN2-scale folded) [+ fused 1x1 downsample] + bias
#                                                          -> one banded matmul
#   + identity shortcut (if applicable) -> ReLU
# ---------------------------------------------------------------------------
def resblock_kernel(x_ref, w1_ref, w2_ref, b_ref, o_ref, xpad_ref, mid_ref, *,
                    stride, H, Ho, Lin, Lp, L1, L1p, Lout, identity):
    nb = x_ref.shape[0]

    # ---- stage the input into VMEM with zero H-halo rows and the packed row
    #      width padded to a 128-lane multiple (so every kw-tap window below
    #      starts on a vreg lane boundary).  All ref stores are full lane width.
    zrow = jnp.zeros((nb, 1, Lp), jnp.float32)
    xpad_ref[:, pl.ds(0, 1), :] = zrow
    xpad_ref[:, pl.ds(H + 1, 1), :] = zrow
    xi = x_ref[...]                                        # (nb, H, Lin) f32
    if Lp > Lin:
        xi = jnp.concatenate(
            [xi, jnp.zeros((nb, H, Lp - Lin), jnp.float32)], axis=-1)
    xpad_ref[:, pl.ds(1, H), :] = xi

    def row_win(start):            # Ho rows: start, start+stride, ...
        if stride == 1:
            return xpad_ref[:, pl.ds(start, Ho), :]
        return xpad_ref[:, pl.ds(start, Ho, stride=stride), :]

    wins = [row_win(kh) for kh in range(3)]                # 3 x (nb, Ho, Lp)

    # ---- conv1 (3x3, stride) + BN1 (scale folded into w1) + ReLU: one matmul.
    r1 = jnp.concatenate(wins, axis=-1).reshape(nb * Ho, 3 * Lp)
    h1 = jnp.dot(r1.astype(jnp.bfloat16), w1_ref[...],
                 preferred_element_type=jnp.float32)
    h1 = jnp.maximum(h1 + b_ref[:, pl.ds(0, L1)], 0.0)     # (nb*Ho, L1)

    # ---- conv2's H-halo scratch (bf16, lane padded): zero only the two halo
    #      rows, write the interior once, already cast to the MXU dtype.
    zmid = jnp.zeros((nb, 1, L1p), jnp.bfloat16)
    mid_ref[:, pl.ds(0, 1), :] = zmid
    mid_ref[:, pl.ds(Ho + 1, 1), :] = zmid
    h1b = h1.reshape(nb, Ho, L1).astype(jnp.bfloat16)
    if L1p > L1:
        h1b = jnp.concatenate(
            [h1b, jnp.zeros((nb, Ho, L1p - L1), jnp.bfloat16)], axis=-1)
    mid_ref[:, pl.ds(1, Ho), :] = h1b

    # ---- conv2 (3x3, stride 1) + BN2 (scale folded), with the projection
    #      shortcut fused into the same matmul when it is not the identity.
    pieces = [mid_ref[:, pl.ds(kh, Ho), :] for kh in range(3)]
    if not identity:
        pieces.append(wins[1].astype(jnp.bfloat16))   # same strided rows the
                                                      # 1x1 downsample reads
    r2 = jnp.concatenate(pieces, axis=-1).reshape(nb * Ho, -1)
    h2 = jnp.dot(r2, w2_ref[...], preferred_element_type=jnp.float32)
    h2 = h2 + b_ref[:, pl.ds(L1, Lout)]

    if identity:                                      # exact f32 shortcut add
        short = lax.slice(wins[1], (0, 0, 0), (nb, Ho, Lout))
        h2 = h2 + short.reshape(nb * Ho, Lout)

    o_ref[...] = jnp.maximum(h2, 0.0).reshape(nb, Ho, Lout).astype(o_ref.dtype)


# ---------------------------------------------------------------------------
# Banded weight builders (wrapper-side, pure XLA).
# ---------------------------------------------------------------------------
def _band_3x3(w_hwio, w_in, w_out, stride):
    """(3,3,Ci,Co) HWIO -> (3*w_in*Ci, w_out*Co).

    band[(kh, wi, ci), (wo, co)] = w[kh, wi - stride*wo + 1, ci, co] when
    0 <= wi - stride*wo + 1 <= 2, else 0 (this also realises the width pad-1
    zero columns of the conv, so the kernel never pads W).
    """
    _, _, ci, co = w_hwio.shape
    wi = jnp.arange(w_in)[:, None]
    wo = jnp.arange(w_out)[None, :]
    kw = wi - stride * wo + 1                                  # (w_in, w_out)
    valid = (kw >= 0) & (kw <= 2)
    g = jnp.take(w_hwio, jnp.clip(kw, 0, 2), axis=1)           # (3,w_in,w_out,Ci,Co)
    g = jnp.where(valid[None, :, :, None, None], g, 0.0)
    g = g.transpose(0, 1, 3, 2, 4)                             # (3,w_in,Ci,w_out,Co)
    return g.reshape(3 * w_in * ci, w_out * co)


def _band_1x1(wd_io, w_in, w_out, stride):
    """(Ci,Co) -> (w_in*Ci, w_out*Co); nonzero iff wi == stride*wo."""
    ci, co = wd_io.shape
    sel = (jnp.arange(w_in)[:, None] == stride * jnp.arange(w_out)[None, :])
    big = wd_io[None, :, None, :] * sel[:, None, :, None].astype(wd_io.dtype)
    return big.reshape(w_in * ci, w_out * co)


def _pad_k_rows(mat, groups, k, kp):
    """Pad each of `groups` K-blocks of `mat` ((groups*k, n)) to kp rows with
    zeros -> (groups*kp, n), matching the kernel's lane-padded operands."""
    if kp == k:
        return mat
    n = mat.shape[1]
    return jnp.pad(mat.reshape(groups, k, n),
                   ((0, 0), (0, kp - k), (0, 0))).reshape(groups * kp, n)


# ---------------------------------------------------------------------------
# Wrapper: NCHW in/out; builds packed/banded parameters and calls the kernel.
# ---------------------------------------------------------------------------
def resblock_forward(x_nchw, params, *, stride=1):
    w1, w2, wd, s1, b1, s2, b2, sd, bd = params      # w1/w2 HWIO, wd (Cin,Cout)
    N, Cin, H, W = x_nchw.shape
    C1 = w1.shape[-1]
    Cout = w2.shape[-1]
    Ho = (H + 2 - 3) // stride + 1
    Wo = (W + 2 - 3) // stride + 1
    identity = (Cin == Cout) and (stride == 1)

    Lin, L1, Lout = W * Cin, Wo * C1, Wo * Cout
    Lp, L1p = _round_up(Lin, 128), _round_up(L1, 128)

    # Packed rows: NCHW -> NHWC -> (N, H, W*Cin).  No pad here: H-halo rows and
    # the 128-lane padding are added inside the kernel's VMEM scratch.
    x = jnp.transpose(x_nchw, (0, 2, 3, 1)).astype(jnp.float32).reshape(N, H, Lin)

    tile = lambda v: jnp.tile(v.astype(jnp.float32), Wo)   # per-(wo,co) column

    # Banded weights with BN scales folded in (fold in f32, then cast to bf16).
    w1b = _band_3x3(w1.astype(jnp.float32), W, Wo, stride) * tile(s1)[None, :]
    w1b = _pad_k_rows(w1b, 3, Lin, Lp).astype(jnp.bfloat16)          # (3*Lp, L1)
    w2b = _band_3x3(w2.astype(jnp.float32), Wo, Wo, 1) * tile(s2)[None, :]
    w2b = _pad_k_rows(w2b, 3, L1, L1p)

    if identity:
        w2full = w2b.astype(jnp.bfloat16)                            # (3*L1p, Lout)
        bias = jnp.concatenate([tile(b1), tile(b2)])[None, :]
    else:
        # Fuse the 1x1 downsample into conv2's matmul: stack its band under w2.
        wdb = _band_1x1(wd.astype(jnp.float32), W, Wo, stride) * tile(sd)[None, :]
        wdb = _pad_k_rows(wdb, 1, Lin, Lp)
        w2full = jnp.concatenate([w2b, wdb], axis=0).astype(jnp.bfloat16)
        bias = jnp.concatenate([tile(b1), tile(b2) + tile(bd)])[None, :]

    # Images per grid step: raise the matmul M (= nb*Ho) toward the MXU depth
    # first (largest FLOP-utilisation lever), then keep as many grid steps as
    # possible for pipelining / v7x's two TensorCores.  N=2 caps M at N*Ho.
    target_rows = 256
    nb_needed = -(-target_rows // Ho)
    divisors = [d for d in range(1, N + 1) if N % d == 0]
    nb = next((d for d in divisors if d >= nb_needed), divisors[-1])

    kern = functools.partial(resblock_kernel, stride=stride, H=H, Ho=Ho,
                             Lin=Lin, Lp=Lp, L1=L1, L1p=L1p, Lout=Lout,
                             identity=identity)

    out_packed = pl.pallas_call(
        kern,
        out_shape=jax.ShapeDtypeStruct((N, Ho, Lout), jnp.float32),
        grid=(N // nb,),
        in_specs=[
            pl.BlockSpec((nb, H, Lin), lambda n: (n, 0, 0)),
            pl.BlockSpec(w1b.shape, lambda n: (0, 0)),
            pl.BlockSpec(w2full.shape, lambda n: (0, 0)),
            pl.BlockSpec(bias.shape, lambda n: (0, 0)),
        ],
        out_specs=pl.BlockSpec((nb, Ho, Lout), lambda n: (n, 0, 0)),
        scratch_shapes=[
            pltpu.VMEM((nb, H + 2, Lp), jnp.float32),      # padded input rows
            pltpu.VMEM((nb, Ho + 2, L1p), jnp.bfloat16),   # conv1 activations
        ],
        compiler_params=pltpu.CompilerParams(
            dimension_semantics=("parallel",)),
    )(x, w1b, w2full, bias)

    out = out_packed.reshape(N, Ho, Wo, Cout)
    return jnp.transpose(out, (0, 3, 1, 2))                    # -> NCHW


# ---------------------------------------------------------------------------
# Pure-JAX reference (lax conv), bf16 conv operands / f32 accumulation to
# mirror the kernel's MXU numerics; BN scale applied post-conv in f32.
# ---------------------------------------------------------------------------
def resblock_reference(x_nchw, params, *, stride=1):
    w1, w2, wd, s1, b1, s2, b2, sd, bd = params
    x = jnp.transpose(x_nchw, (0, 2, 3, 1)).astype(jnp.float32)
    Cin, Cout = x.shape[-1], w2.shape[-1]
    identity = (Cin == Cout) and (stride == 1)

    def conv(a, w, s, pad):
        return lax.conv_general_dilated(
            a.astype(jnp.bfloat16), w.astype(jnp.bfloat16), (s, s), pad,
            dimension_numbers=("NHWC", "HWIO", "NHWC"),
            preferred_element_type=jnp.float32)

    h = conv(x, w1, stride, [(1, 1), (1, 1)])
    h = jnp.maximum(h * s1 + b1, 0.0)
    h = conv(h, w2, 1, [(1, 1), (1, 1)]) * s2 + b2
    if identity:
        short = x
    else:
        short = conv(x, wd[None, None], stride, [(0, 0), (0, 0)]) * sd + bd
    out = jnp.maximum(h + short, 0.0)
    return jnp.transpose(out, (0, 3, 1, 2))


# ---------------------------------------------------------------------------
# Test harness.
# ---------------------------------------------------------------------------
def _bn_scale_bias(key, c, eps=1e-5):
    k1, k2, k3, k4 = jax.random.split(key, 4)
    gamma = jax.random.uniform(k1, (c,), minval=0.5, maxval=1.5)
    beta = jax.random.normal(k2, (c,)) * 0.1
    mean = jax.random.normal(k3, (c,)) * 0.1
    var = jax.random.uniform(k4, (c,), minval=0.5, maxval=1.5)
    scale = gamma / jnp.sqrt(var + eps)
    return scale.astype(jnp.float32), (beta - mean * scale).astype(jnp.float32)


def _make_params(key, in_planes, mid_planes, out_planes):
    # ResBlock: conv1 out-channels = mid_planes - out_planes, conv2 out = out_planes.
    c1 = mid_planes - out_planes
    cout = out_planes
    ks = jax.random.split(key, 6)
    w1 = (jax.random.normal(ks[0], (3, 3, in_planes, c1)) * 0.2).astype(jnp.float32)
    w2 = (jax.random.normal(ks[1], (3, 3, c1, cout)) * 0.2).astype(jnp.float32)
    wd = (jax.random.normal(ks[2], (in_planes, cout)) * 0.2).astype(jnp.float32)
    s1, b1 = _bn_scale_bias(ks[3], c1)
    s2, b2 = _bn_scale_bias(ks[4], cout)
    sd, bd = _bn_scale_bias(ks[5], cout)
    return (w1, w2, wd, s1, b1, s2, b2, sd, bd)


if __name__ == "__main__":
    key = jax.random.PRNGKey(0)
    N, H, W = 2, 16, 16
    # (in_planes, mid_planes, out_planes, stride):
    #   projection shortcut / stride-2 projection / identity shortcut.
    configs = [(4, 16, 8, 1), (4, 16, 8, 2), (8, 24, 8, 1)]
    for (cin, mid, cout, stride) in configs:
        key, kp, kx = jax.random.split(key, 3)
        params = _make_params(kp, cin, mid, cout)
        x = jax.random.normal(kx, (N, cin, H, W), dtype=jnp.float32)
        out = jax.block_until_ready(resblock_forward(x, params, stride=stride))
        ref = jax.block_until_ready(resblock_reference(x, params, stride=stride))
        # atol covers the extra bf16 rounding from folding the BN scale into
        # the banded weights (the reference applies the scale in f32 post-conv).
        np.testing.assert_allclose(np.asarray(out), np.asarray(ref),
                                   rtol=2e-2, atol=5e-2)
    print("KERNEL_OK")
</pallas_src>

<mosaic_0001>
module attributes {stable_mosaic.version = 11 : i64} {
  func.func @resblock_kernel(%arg0: i32, %arg1: memref<2x16x64xf32, #tpu.memory_space<vmem>>, %arg2: memref<384x128xbf16, #tpu.memory_space<vmem>>, %arg3: memref<512x128xbf16, #tpu.memory_space<vmem>>, %arg4: memref<1x256xf32, #tpu.memory_space<vmem>>, %arg5: memref<2x16x128xf32, #tpu.memory_space<vmem>>, %arg6: memref<2x18x128xf32, #tpu.memory_space<vmem>>, %arg7: memref<2x18x128xbf16, #tpu.memory_space<vmem>>) attributes {dimension_semantics = [#tpu.dimension_semantics<parallel>], iteration_bounds = array<i64: 1>, scalar_prefetch = 0 : i64, scratch_operands = 2 : i64, tpu.core_type = #tpu.core_type<tc>, window_params = [{transform_indices = @transform_0, window_bounds = array<i64: 2, 16, 64>}, {pipeline_mode = #tpu.pipeline_mode<synchronous>, transform_indices = @transform_1, window_bounds = array<i64: 384, 128>}, {pipeline_mode = #tpu.pipeline_mode<synchronous>, transform_indices = @transform_2, window_bounds = array<i64: 512, 128>}, {pipeline_mode = #tpu.pipeline_mode<synchronous>, transform_indices = @transform_3, window_bounds = array<i64: 1, 256>}, {transform_indices = @transform_4, window_bounds = array<i64: 2, 16, 128>}]} {
    %cst = arith.constant 0.000000e+00 : f32
    %0 = vector.broadcast %cst : f32 to vector<2x1x128xf32>
    %c0 = arith.constant 0 : index
    %c0_0 = arith.constant 0 : index
    %c0_1 = arith.constant 0 : index
    %1 = vector.load %arg6[%c0, %c0_0, %c0_1] : memref<2x18x128xf32, #tpu.memory_space<vmem>>, vector<2x1x128xf32>
    tpu.vector_store %arg6[%c0, %c0_0, %c0_1], %0 {strides = array<i32>} : memref<2x18x128xf32, #tpu.memory_space<vmem>>, vector<2x1x128xf32>,
    %c0_2 = arith.constant 0 : index
    %c17 = arith.constant 17 : index
    %c0_3 = arith.constant 0 : index
    %2 = vector.load %arg6[%c0_2, %c17, %c0_3] : memref<2x18x128xf32, #tpu.memory_space<vmem>>, vector<2x1x128xf32>
    tpu.vector_store %arg6[%c0_2, %c17, %c0_3], %0 {strides = array<i32>} : memref<2x18x128xf32, #tpu.memory_space<vmem>>, vector<2x1x128xf32>,
    %c0_4 = arith.constant 0 : index
    %c0_5 = arith.constant 0 : index
    %c0_6 = arith.constant 0 : index
    %3 = vector.load %arg1[%c0_4, %c0_5, %c0_6] : memref<2x16x64xf32, #tpu.memory_space<vmem>>, vector<2x16x64xf32>
    %cst_7 = arith.constant 0.000000e+00 : f32
    %4 = vector.broadcast %cst_7 : f32 to vector<2x16x64xf32>
    %5 = tpu.concatenate %3, %4 in 2 : vector<2x16x64xf32>, vector<2x16x64xf32> -> vector<2x16x128xf32>
    %c0_8 = arith.constant 0 : index
    %c1 = arith.constant 1 : index
    %c0_9 = arith.constant 0 : index
    %6 = vector.load %arg6[%c0_8, %c1, %c0_9] : memref<2x18x128xf32, #tpu.memory_space<vmem>>, vector<2x16x128xf32>
    tpu.vector_store %arg6[%c0_8, %c1, %c0_9], %5 {strides = array<i32>} : memref<2x18x128xf32, #tpu.memory_space<vmem>>, vector<2x16x128xf32>,
    %c0_10 = arith.constant 0 : index
    %c0_11 = arith.constant 0 : index
    %c0_12 = arith.constant 0 : index
    %7 = vector.load %arg6[%c0_10, %c0_11, %c0_12] : memref<2x18x128xf32, #tpu.memory_space<vmem>>, vector<2x16x128xf32>
    %c0_13 = arith.constant 0 : index
    %c1_14 = arith.constant 1 : index
    %c0_15 = arith.constant 0 : index
    %8 = vector.load %arg6[%c0_13, %c1_14, %c0_15] : memref<2x18x128xf32, #tpu.memory_space<vmem>>, vector<2x16x128xf32>
    %c0_16 = arith.constant 0 : index
    %c2 = arith.constant 2 : index
    %c0_17 = arith.constant 0 : index
    %9 = vector.load %arg6[%c0_16, %c2, %c0_17] : memref<2x18x128xf32, #tpu.memory_space<vmem>>, vector<2x16x128xf32>
    %10 = tpu.concatenate %7, %8, %9 in 2 : vector<2x16x128xf32>, vector<2x16x128xf32>, vector<2x16x128xf32> -> vector<2x16x384xf32>
    %11 = vector.shape_cast %10 : vector<2x16x384xf32> to vector<32x384xf32>
    %12 = arith.truncf %11 : vector<32x384xf32> to vector<32x384xbf16>
    %c0_18 = arith.constant 0 : index
    %c0_19 = arith.constant 0 : index
    %13 = vector.load %arg2[%c0_18, %c0_19] : memref<384x128xbf16, #tpu.memory_space<vmem>>, vector<384x128xbf16>
    %cst_20 = arith.constant dense<0.000000e+00> : vector<32x128xf32>
    %14 = tpu.matmul %12, %13, %cst_20 {dimension_numbers = #tpu.dot_dimension_numbers<[1], [0], [0], [1], [0, 0, 1, 1], [], []>} : vector<32x384xbf16>, vector<384x128xbf16>, vector<32x128xf32> -> vector<32x128xf32>
    %c0_21 = arith.constant 0 : index
    %c0_22 = arith.constant 0 : index
    %15 = vector.load %arg4[%c0_21, %c0_22] : memref<1x256xf32, #tpu.memory_space<vmem>>, vector<1x128xf32>
    %16 = vector.broadcast %15 : vector<1x128xf32> to vector<32x128xf32>
    %17 = arith.addf %14, %16 : vector<32x128xf32>
    %cst_23 = arith.constant 0.000000e+00 : f32
    %18 = vector.broadcast %cst_23 : f32 to vector<32x128xf32>
    %19 = arith.maximumf %17, %18 : vector<32x128xf32>
    %cst_24 = arith.constant 0.000000e+00 : bf16
    %20 = vector.broadcast %cst_24 : bf16 to vector<2x1x128xbf16>
    %c0_25 = arith.constant 0 : index
    %c0_26 = arith.constant 0 : index
    %c0_27 = arith.constant 0 : index
    %21 = vector.load %arg7[%c0_25, %c0_26, %c0_27] : memref<2x18x128xbf16, #tpu.memory_space<vmem>>, vector<2x1x128xbf16>
    tpu.vector_store %arg7[%c0_25, %c0_26, %c0_27], %20 {strides = array<i32>} : memref<2x18x128xbf16, #tpu.memory_space<vmem>>, vector<2x1x128xbf16>,
    %c0_28 = arith.constant 0 : index
    %c17_29 = arith.constant 17 : index
    %c0_30 = arith.constant 0 : index
    %22 = vector.load %arg7[%c0_28, %c17_29, %c0_30] : memref<2x18x128xbf16, #tpu.memory_space<vmem>>, vector<2x1x128xbf16>
    tpu.vector_store %arg7[%c0_28, %c17_29, %c0_30], %20 {strides = array<i32>} : memref<2x18x128xbf16, #tpu.memory_space<vmem>>, vector<2x1x128xbf16>,
    %23 = vector.shape_cast %19 : vector<32x128xf32> to vector<2x16x128xf32>
    %24 = arith.truncf %23 : vector<2x16x128xf32> to vector<2x16x128xbf16>
    %c0_31 = arith.constant 0 : index
    %c1_32 = arith.constant 1 : index
    %c0_33 = arith.constant 0 : index
    %25 = vector.load %arg7[%c0_31, %c1_32, %c0_33] : memref<2x18x128xbf16, #tpu.memory_space<vmem>>, vector<2x16x128xbf16>
    tpu.vector_store %arg7[%c0_31, %c1_32, %c0_33], %24 {strides = array<i32>} : memref<2x18x128xbf16, #tpu.memory_space<vmem>>, vector<2x16x128xbf16>,
    %c0_34 = arith.constant 0 : index
    %c0_35 = arith.constant 0 : index
    %c0_36 = arith.constant 0 : index
    %26 = vector.load %arg7[%c0_34, %c0_35, %c0_36] : memref<2x18x128xbf16, #tpu.memory_space<vmem>>, vector<2x16x128xbf16>
    %c0_37 = arith.constant 0 : index
    %c1_38 = arith.constant 1 : index
    %c0_39 = arith.constant 0 : index
    %27 = vector.load %arg7[%c0_37, %c1_38, %c0_39] : memref<2x18x128xbf16, #tpu.memory_space<vmem>>, vector<2x16x128xbf16>
    %c0_40 = arith.constant 0 : index
    %c2_41 = arith.constant 2 : index
    %c0_42 = arith.constant 0 : index
    %28 = vector.load %arg7[%c0_40, %c2_41, %c0_42] : memref<2x18x128xbf16, #tpu.memory_space<vmem>>, vector<2x16x128xbf16>
    %29 = arith.truncf %8 : vector<2x16x128xf32> to vector<2x16x128xbf16>
    %30 = tpu.concatenate %26, %27, %28, %29 in 2 : vector<2x16x128xbf16>, vector<2x16x128xbf16>, vector<2x16x128xbf16>, vector<2x16x128xbf16> -> vector<2x16x512xbf16>
    %31 = vector.shape_cast %30 : vector<2x16x512xbf16> to vector<32x512xbf16>
    %c0_43 = arith.constant 0 : index
    %c0_44 = arith.constant 0 : index
    %32 = vector.load %arg3[%c0_43, %c0_44] : memref<512x128xbf16, #tpu.memory_space<vmem>>, vector<512x128xbf16>
    %cst_45 = arith.constant dense<0.000000e+00> : vector<32x128xf32>
    %33 = tpu.matmul %31, %32, %cst_45 {dimension_numbers = #tpu.dot_dimension_numbers<[1], [0], [0], [1], [0, 0, 1, 1], [], []>} : vector<32x512xbf16>, vector<512x128xbf16>, vector<32x128xf32> -> vector<32x128xf32>
    %c0_46 = arith.constant 0 : index
    %c128 = arith.constant 128 : index
    %34 = vector.load %arg4[%c0_46, %c128] : memref<1x256xf32, #tpu.memory_space<vmem>>, vector<1x128xf32>
    %35 = vector.broadcast %34 : vector<1x128xf32> to vector<32x128xf32>
    %36 = arith.addf %33, %35 : vector<32x128xf32>
    %cst_47 = arith.constant 0.000000e+00 : f32
    %37 = vector.broadcast %cst_47 : f32 to vector<32x128xf32>
    %38 = arith.maximumf %36, %37 : vector<32x128xf32>
    %39 = vector.shape_cast %38 : vector<32x128xf32> to vector<2x16x128xf32>
    %c0_48 = arith.constant 0 : index
    %c0_49 = arith.constant 0 : index
    %c0_50 = arith.constant 0 : index
    %40 = vector.load %arg5[%c0_48, %c0_49, %c0_50] : memref<2x16x128xf32, #tpu.memory_space<vmem>>, vector<2x16x128xf32>
    tpu.vector_store %arg5[%c0_48, %c0_49, %c0_50], %39 {strides = array<i32>} : memref<2x16x128xf32, #tpu.memory_space<vmem>>, vector<2x16x128xf32>,
    return
  }
  func.func @transform_0(%arg0: i32) -> (i32, i32, i32) {
    %c0_i32 = arith.constant 0 : i32
    %c0_i32_0 = arith.constant 0 : i32
    %c0_i32_1 = arith.constant 0 : i32
    return %arg0, %c0_i32, %c0_i32_0 : i32, i32, i32
  }
  func.func @transform_1(%arg0: i32) -> (i32, i32) {
    %c0_i32 = arith.constant 0 : i32
    %c0_i32_0 = arith.constant 0 : i32
    %c0_i32_1 = arith.constant 0 : i32
    return %c0_i32, %c0_i32_0 : i32, i32
  }
  func.func @transform_2(%arg0: i32) -> (i32, i32) {
    %c0_i32 = arith.constant 0 : i32
    %c0_i32_0 = arith.constant 0 : i32
    %c0_i32_1 = arith.constant 0 : i32
    return %c0_i32, %c0_i32_0 : i32, i32
  }
  func.func @transform_3(%arg0: i32) -> (i32, i32) {
    %c0_i32 = arith.constant 0 : i32
    %c0_i32_0 = arith.constant 0 : i32
    %c0_i32_1 = arith.constant 0 : i32
    return %c0_i32, %c0_i32_0 : i32, i32
  }
  func.func @transform_4(%arg0: i32) -> (i32, i32, i32) {
    %c0_i32 = arith.constant 0 : i32
    %c0_i32_0 = arith.constant 0 : i32
    %c0_i32_1 = arith.constant 0 : i32
    return %arg0, %c0_i32, %c0_i32_0 : i32, i32, i32
  }
}

</mosaic_0001>

<llo_original>
// kernel: tpu_custom_call.1
$region0: #{tpu_custom_call.1}
  #allocation0 [shape = 'u32[]', space=smem, size = 0x4, offset = 0x4, fixed_abs, tag = 'smem constant byte address 0x4 - core index']
  #allocation1 [shape = 'u32[144,128]{1,0:T(1,128)}', space=vmem, size = 0x12000, scoped, tag = 'internal scratch']
  #allocation2 [shape = 'f32[2,18,128]{2,1,0:T(8,128)}', space=vmem, size = 0x6000, scoped, tag = 'scratch operand']
  #allocation3 [shape = 'bf16[2,18,128]{2,1,0:T(8,128)(2,1)}', space=vmem, size = 0x3000, scoped, tag = 'scratch operand']
  %s0 = inlined_call_operand.hbm [shape: f32[2,16,64], index: 0, kind: input, shape index: {}]
  %s1 = inlined_call_operand.hbm [shape: bf16[384,128], index: 1, kind: input, shape index: {}]
  %s2 = inlined_call_operand.hbm [shape: bf16[512,128], index: 2, kind: input, shape index: {}]
  %s3 = inlined_call_operand.vmem [shape: f32[1,256], index: 3, kind: input, shape index: {}]
  %s4 = inlined_call_operand.hbm [shape: f32[2,16,128], index: 4, kind: output, shape index: {}]
  %s5 = sld [smem:[#allocation0]]
  $region38: #{tpu_custom_call.1} parent=0
    _
  %s7 = ssub.s32 1, %s5
  %s8 = scalar_select 0, %s7, %s5
  $region1: #{tpu_custom_call.1} parent=0
    #allocation4 [shape = 'u8[16384]{0}', space=vmem, size = 0x4000, scoped, tag = 'input window, operand 0, single buffered']
    #allocation5 [shape = 's32[1]{0}', space=sflag, size = 0x4, scoped, tag = 'scoped memory for tpu_custom_call.1']
    #allocation6 [shape = 's32[1]{0}', space=sflag, size = 0x4, scoped, tag = 'scoped memory for tpu_custom_call.1']
    #allocation7 [shape = 'u8[98304]{0}', space=vmem, size = 0x18000, scoped, tag = 'input window, operand 1, single buffered']
    #allocation8 [shape = 's32[1]{0}', space=sflag, size = 0x4, scoped, tag = 'scoped memory for tpu_custom_call.1']
    #allocation9 [shape = 'u8[131072]{0}', space=vmem, size = 0x20000, scoped, tag = 'input window, operand 2, single buffered']
    #allocation10 [shape = 'u8[16384]{0}', space=vmem, size = 0x4000, scoped, tag = 'output window, operand 0, single buffered']
    %9 = vsyncpa [#allocation5], 0
    %10 = vsyncpa [#allocation8], 0
    %11 = vsyncpa [#allocation6], 0
    // Predicated region
    $region2: #{tpu_custom_call.1} parent=1 // pred_check
      _
    $region3: #{tpu_custom_call.1} parent=1 // pred_check_branch
      %13 = sbr.rel (0) target = $region5
    $region4: #{tpu_custom_call.1} parent=1 // pred_region
      %s15 = ssub.s32 512, 512
      %16 = vsyncadd [#allocation5], %s15
      %s17 = sshll.u32 [#allocation4], 4
      %s18 = int_to_ptr.vmem [resolvable:$true] %s17
      %23 = dma.hbm_to_vmem [thread:$0]  %s0, 512, %s18, [#allocation5], 128, 128, 8
    $region5: #{tpu_custom_call.1} parent=1 // pred_fallthru
      _
    // Predicated region
    $region6: #{tpu_custom_call.1} parent=1 // pred_check
      _
    $region7: #{tpu_custom_call.1} parent=1 // pred_check_branch
      %25 = sbr.rel (0) target = $region9
    $region8: #{tpu_custom_call.1} parent=1 // pred_region
      %s27 = ssub.s32 3072, 3072
      %28 = vsyncadd [#allocation8], %s27
      %s29 = sshll.u32 [#allocation7], 4
      %s30 = int_to_ptr.vmem [resolvable:$true] %s29
      %35 = dma.hbm_to_vmem [thread:$0]  %s1, 3072, %s30, [#allocation8], 64, 64, 4
    $region9: #{tpu_custom_call.1} parent=1 // pred_fallthru
      _
    // Predicated region
    $region10: #{tpu_custom_call.1} parent=1 // pred_check
      _
    $region11: #{tpu_custom_call.1} parent=1 // pred_check_branch
      %37 = sbr.rel (0) target = $region13
    $region12: #{tpu_custom_call.1} parent=1 // pred_region
      %s39 = ssub.s32 4096, 4096
      %40 = vsyncadd [#allocation8], %s39
      %s41 = sshll.u32 [#allocation9], 4
      %s42 = int_to_ptr.vmem [resolvable:$true] %s41
      %47 = dma.hbm_to_vmem [thread:$0]  %s2, 4096, %s42, [#allocation8], 64, 64, 4
    $region13: #{tpu_custom_call.1} parent=1 // pred_fallthru
      _
    // Predicated region
    $region14: #{tpu_custom_call.1} parent=1 // pred_check
      _
    $region15: #{tpu_custom_call.1} parent=1 // pred_check_branch
      %49 = sbr.rel (0) target = $region17
    $region16: #{tpu_custom_call.1} parent=1 // pred_region
      _
    $region17: #{tpu_custom_call.1} parent=1 // pred_fallthru
      _
    // Predicated region
    $region18: #{tpu_custom_call.1} parent=1 // pred_check
      _
    $region19: #{tpu_custom_call.1} parent=1 // pred_check_branch
      %51 = sbr.rel (0) target = $region21
    $region20: #{tpu_custom_call.1} parent=1 // pred_region
      %52 = dma.done [#allocation5], 512
    $region21: #{tpu_custom_call.1} parent=1 // pred_fallthru
      _
    // Predicated region
    $region22: #{tpu_custom_call.1} parent=1 // pred_check
      _
    $region23: #{tpu_custom_call.1} parent=1 // pred_check_branch
      %54 = sbr.rel (0) target = $region25
    $region24: #{tpu_custom_call.1} parent=1 // pred_region
      %55 = dma.done [#allocation8], 3072
    $region25: #{tpu_custom_call.1} parent=1 // pred_fallthru
      _
    // Predicated region
    $region26: #{tpu_custom_call.1} parent=1 // pred_check
      _
    $region27: #{tpu_custom_call.1} parent=1 // pred_check_branch
      %57 = sbr.rel (0) target = $region29
    $region28: #{tpu_custom_call.1} parent=1 // pred_region
      %58 = dma.done [#allocation8], 4096
    $region29: #{tpu_custom_call.1} parent=1 // pred_fallthru
      _
    %60 = vst [vmem:[#allocation2] sm:$0x1] 0.0
    %61 = vst [vmem:[#allocation2 + $0x18] sm:$0x1] 0.0
    %62 = vst [vmem:[#allocation2 + $0x11] sm:$0x1] 0.0
    %63 = vst [vmem:[#allocation2 + $0x29] sm:$0x1] 0.0
    %v64 = vld [vmem:[#allocation4] sm:$0xff]
    %v65 = vld [vmem:[#allocation4 + $0x8] sm:$0xff]
    %v66 = vld [vmem:[#allocation4 + $0x10] sm:$0xff]
    %v67 = vld [vmem:[#allocation4 + $0x18] sm:$0xff]
    %vm68 = vcmask 523264
    %v69 = vsel %vm68, %v64, 0.0
    %v70 = vsel %vm68, %v65, 0.0
    %v71 = vsel %vm68, %v66, 0.0
    %v72 = vsel %vm68, %v67, 0.0
    %73 = vst [vmem:[#allocation2 + $0x1] sm:$0xff] %v69
    %74 = vst [vmem:[#allocation2 + $0x9] sm:$0xff] %v70
    %75 = vst [vmem:[#allocation2 + $0x19] sm:$0xff] %v71
    %76 = vst [vmem:[#allocation2 + $0x21] sm:$0xff] %v72
    %v77 = vld [vmem:[#allocation2] sm:$0xff]
    %v78 = vld [vmem:[#allocation2 + $0x8] sm:$0xff]
    %v79 = vld [vmem:[#allocation2 + $0x18] sm:$0xff]
    %v80 = vld [vmem:[#allocation2 + $0x20] sm:$0xff]
    %v81 = vld [vmem:[#allocation2 + $0x1] sm:$0xff]
    %v82 = vld [vmem:[#allocation2 + $0x9] sm:$0xff]
    %v83 = vld [vmem:[#allocation2 + $0x19] sm:$0xff]
    %v84 = vld [vmem:[#allocation2 + $0x21] sm:$0xff]
    %v85 = vld [vmem:[#allocation2 + $0x2] sm:$0xff]
    %v86 = vld [vmem:[#allocation2 + $0xa] sm:$0xff]
    %v87 = vld [vmem:[#allocation2 + $0x1a] sm:$0xff]
    %v88 = vld [vmem:[#allocation2 + $0x22] sm:$0xff]
    %v89 = vpack.c.bf16 %v78, %v77
    %v90 = vpack.c.bf16 %v82, %v81
    %v91 = vpack.c.bf16 %v86, %v85
    %v92 = vpack.c.bf16 %v80, %v79
    %v93 = vpack.c.bf16 %v84, %v83
    %v94 = vpack.c.bf16 %v88, %v87
    %v95 = vld [vmem:[#allocation7] sm:$0xf]
    %v96 = vld [vmem:[#allocation7 + $0x4] sm:$0xf]
    %v97 = vld [vmem:[#allocation7 + $0x8] sm:$0xf]
    %v98 = vld [vmem:[#allocation7 + $0xc] sm:$0xf]
    %v99 = vld [vmem:[#allocation7 + $0x10] sm:$0xf]
    %v100 = vld [vmem:[#allocation7 + $0x14] sm:$0xf]
    %v101 = vld [vmem:[#allocation7 + $0x18] sm:$0xf]
    %v102 = vld [vmem:[#allocation7 + $0x1c] sm:$0xf]
    %v103 = vld [vmem:[#allocation7 + $0x20] sm:$0xf]
    %v104 = vld [vmem:[#allocation7 + $0x24] sm:$0xf]
    %v105 = vld [vmem:[#allocation7 + $0x28] sm:$0xf]
    %v106 = vld [vmem:[#allocation7 + $0x2c] sm:$0xf]
    %v107 = vld [vmem:[#allocation7 + $0x30] sm:$0xf]
    %v108 = vld [vmem:[#allocation7 + $0x34] sm:$0xf]
    %v109 = vld [vmem:[#allocation7 + $0x38] sm:$0xf]
    %v110 = vld [vmem:[#allocation7 + $0x3c] sm:$0xf]
    %v111 = vld [vmem:[#allocation7 + $0x40] sm:$0xf]
    %v112 = vld [vmem:[#allocation7 + $0x44] sm:$0xf]
    %v113 = vld [vmem:[#allocation7 + $0x48] sm:$0xf]
    %v114 = vld [vmem:[#allocation7 + $0x4c] sm:$0xf]
    %v115 = vld [vmem:[#allocation7 + $0x50] sm:$0xf]
    %v116 = vld [vmem:[#allocation7 + $0x54] sm:$0xf]
    %v117 = vld [vmem:[#allocation7 + $0x58] sm:$0xf]
    %v118 = vld [vmem:[#allocation7 + $0x5c] sm:$0xf]
    %v119 = vld [vmem:[#allocation7 + $0x60] sm:$0xf]
    %v120 = vld [vmem:[#allocation7 + $0x64] sm:$0xf]
    %v121 = vld [vmem:[#allocation7 + $0x68] sm:$0xf]
    %v122 = vld [vmem:[#allocation7 + $0x6c] sm:$0xf]
    %v123 = vld [vmem:[#allocation7 + $0x70] sm:$0xf]
    %v124 = vld [vmem:[#allocation7 + $0x74] sm:$0xf]
    %v125 = vld [vmem:[#allocation7 + $0x78] sm:$0xf]
    %v126 = vld [vmem:[#allocation7 + $0x7c] sm:$0xf]
    %v127 = vld [vmem:[#allocation7 + $0x80] sm:$0xf]
    %v128 = vld [vmem:[#allocation7 + $0x84] sm:$0xf]
    %v129 = vld [vmem:[#allocation7 + $0x88] sm:$0xf]
    %v130 = vld [vmem:[#allocation7 + $0x8c] sm:$0xf]
    %v131 = vld [vmem:[#allocation7 + $0x90] sm:$0xf]
    %v132 = vld [vmem:[#allocation7 + $0x94] sm:$0xf]
    %v133 = vld [vmem:[#allocation7 + $0x98] sm:$0xf]
    %v134 = vld [vmem:[#allocation7 + $0x9c] sm:$0xf]
    %v135 = vld [vmem:[#allocation7 + $0xa0] sm:$0xf]
    %v136 = vld [vmem:[#allocation7 + $0xa4] sm:$0xf]
    %v137 = vld [vmem:[#allocation7 + $0xa8] sm:$0xf]
    %v138 = vld [vmem:[#allocation7 + $0xac] sm:$0xf]
    %v139 = vld [vmem:[#allocation7 + $0xb0] sm:$0xf]
    %v140 = vld [vmem:[#allocation7 + $0xb4] sm:$0xf]
    %v141 = vld [vmem:[#allocation7 + $0xb8] sm:$0xf]
    %v142 = vld [vmem:[#allocation7 + $0xbc] sm:$0xf]
    %v143 = vld [vmem:[%s3] sm:$0x1]
    %v145 = vlaneseq
    %v146 = vshrl.u32 %v145, 7
    %v147 = vsub.s32 0, %v146
    %v148 = vrot.slane %v143, %v147
    %v198 = vunpack.c.l.b16 %v95
    %v199 = vunpack.c.l.b16 %v96
    %v200 = vunpack.c.l.b16 %v97
    %v201 = vunpack.c.l.b16 %v98
    %v202 = vunpack.c.l.b16 %v99
    %v203 = vunpack.c.l.b16 %v100
    %v204 = vunpack.c.l.b16 %v101
    %v205 = vunpack.c.l.b16 %v102
    %v206 = vunpack.c.l.b16 %v103
    %v207 = vunpack.c.l.b16 %v104
    %v208 = vunpack.c.l.b16 %v105
    %v209 = vunpack.c.l.b16 %v106
    %v210 = vunpack.c.l.b16 %v107
    %v211 = vunpack.c.l.b16 %v108
    %v212 = vunpack.c.l.b16 %v109
    %v213 = vunpack.c.l.b16 %v110
    %v214 = vunpack.c.l.b16 %v111
    %v215 = vunpack.c.l.b16 %v112
    %v216 = vunpack.c.l.b16 %v113
    %v217 = vunpack.c.l.b16 %v114
    %v218 = vunpack.c.l.b16 %v115
    %v219 = vunpack.c.l.b16 %v116
    %v220 = vunpack.c.l.b16 %v117
    %v221 = vunpack.c.l.b16 %v118
    %v222 = vunpack.c.l.b16 %v119
    %v223 = vunpack.c.l.b16 %v120
    %v224 = vunpack.c.l.b16 %v121
    %v225 = vunpack.c.l.b16 %v122
    %v226 = vunpack.c.l.b16 %v123
    %v227 = vunpack.c.l.b16 %v124
    %v228 = vunpack.c.l.b16 %v125
    %v229 = vunpack.c.l.b16 %v126
    %v230 = vunpack.c.l.b16 %v127
    %v231 = vunpack.c.l.b16 %v128
    %v232 = vunpack.c.l.b16 %v129
    %v233 = vunpack.c.l.b16 %v130
    %v234 = vunpack.c.l.b16 %v131
    %v235 = vunpack.c.l.b16 %v132
    %v236 = vunpack.c.l.b16 %v133
    %v237 = vunpack.c.l.b16 %v134
    %v238 = vunpack.c.l.b16 %v135
    %v239 = vunpack.c.l.b16 %v136
    %v240 = vunpack.c.l.b16 %v137
    %v241 = vunpack.c.l.b16 %v138
    %v242 = vunpack.c.l.b16 %v139
    %v243 = vunpack.c.l.b16 %v140
    %v244 = vunpack.c.l.b16 %v141
    %v245 = vunpack.c.l.b16 %v142
    %v246 = vpack.c.b16 %v199, %v198
    %v247 = vpack.c.b16 %v201, %v200
    %v248 = vpack.c.b16 %v203, %v202
    %v249 = vpack.c.b16 %v205, %v204
    %v250 = vpack.c.b16 %v207, %v206
    %v251 = vpack.c.b16 %v209, %v208
    %v252 = vpack.c.b16 %v211, %v210
    %v253 = vpack.c.b16 %v213, %v212
    %v254 = vpack.c.b16 %v215, %v214
    %v255 = vpack.c.b16 %v217, %v216
    %v256 = vpack.c.b16 %v219, %v218
    %v257 = vpack.c.b16 %v221, %v220
    %v258 = vpack.c.b16 %v223, %v222
    %v259 = vpack.c.b16 %v225, %v224
    %v260 = vpack.c.b16 %v227, %v226
    %v261 = vpack.c.b16 %v229, %v228
    %v262 = vpack.c.b16 %v231, %v230
    %v263 = vpack.c.b16 %v233, %v232
    %v264 = vpack.c.b16 %v235, %v234
    %v265 = vpack.c.b16 %v237, %v236
    %v266 = vpack.c.b16 %v239, %v238
    %v267 = vpack.c.b16 %v241, %v240
    %v268 = vpack.c.b16 %v243, %v242
    %v269 = vpack.c.b16 %v245, %v244
    %294 = vmatprep.subr.bf16.mxu0 0
    %295 = vmatpush1.bf16.msra.mxu0 %v246
    %296 = vmatprep.subr.bf16.mxu0 0
    %297 = vmatpush1.bf16.msra.mxu0 %v247
    %298 = vmatprep.subr.bf16.mxu0 0
    %299 = vmatpush1.bf16.msra.mxu0 %v248
    %300 = vmatprep.subr.bf16.mxu0 0
    %301 = vmatpush1.bf16.msra.mxu0 %v249
    %302 = vmatprep.subr.bf16.mxu0 0
    %303 = vmatpush1.bf16.msra.mxu0 %v250
    %304 = vmatprep.subr.bf16.mxu0 0
    %305 = vmatpush1.bf16.msra.mxu0 %v251
    %306 = vmatprep.subr.bf16.mxu0 0
    %307 = vmatpush1.bf16.msra.mxu0 %v252
    %308 = vmatprep.subr.bf16.mxu0 0
    %309 = vmatpush1.bf16.msra.mxu0 %v253
    %310 = vmatprep.subr.bf16.mxu0 0
    %311 = vmatpush1.bf16.msra.mxu0 %v254
    %312 = vmatprep.subr.bf16.mxu0 0
    %313 = vmatpush1.bf16.msra.mxu0 %v255
    %314 = vmatprep.subr.bf16.mxu0 0
    %315 = vmatpush1.bf16.msra.mxu0 %v256
    %316 = vmatprep.subr.bf16.mxu0 0
    %317 = vmatpush1.bf16.msra.mxu0 %v257
    %318 = vmatprep.subr.bf16.mxu0 0
    %319 = vmatpush1.bf16.msra.mxu0 %v258
    %320 = vmatprep.subr.bf16.mxu0 0
    %321 = vmatpush1.bf16.msra.mxu0 %v259
    %322 = vmatprep.subr.bf16.mxu0 0
    %323 = vmatpush1.bf16.msra.mxu0 %v260
    %324 = vmatprep.subr.bf16.mxu0 0
    %325 = vmatpush1.bf16.msra.mxu0 %v261
    %326 = vmatprep.mubr.bf16.mxu0 %v90
    %327 = vmatmul.mubr.bf16.gmra.mrb[0].mxu0 %v89
    %v328 = vpop.f32.mrb[0].mxu0
    %v329 = vadd.f32 %v148, %v328
    %v330 = vpop.f32.mrb[0].mxu0
    %v331 = vpop.f32.mrb[0].mxu0
    %v332 = vadd.f32 %v148, %v331
    %v333 = vpop.f32.mrb[0].mxu0
    %334 = vmatprep.mubr.bf16.mxu0 %v93
    %335 = vmatmul.mubr.bf16.gmra.mrb[0].mxu0 %v92
    %v336 = vpop.f32.mrb[0].mxu0
    %v337 = vadd.f32 %v148, %v336
    %v338 = vpop.f32.mrb[0].mxu0
    %v339 = vpop.f32.mrb[0].mxu0
    %v340 = vadd.f32 %v148, %v339
    %v341 = vpop.f32.mrb[0].mxu0
    %342 = vdwg.mxu0
    %343 = vmatprep.subr.bf16.mxu0 0
    %344 = vmatpush1.bf16.msra.mxu0 %v262
    %345 = vmatprep.subr.bf16.mxu0 0
    %346 = vmatpush1.bf16.msra.mxu0 %v263
    %347 = vmatprep.subr.bf16.mxu0 0
    %348 = vmatpush1.bf16.msra.mxu0 %v264
    %349 = vmatprep.subr.bf16.mxu0 0
    %350 = vmatpush1.bf16.msra.mxu0 %v265
    %351 = vmatprep.subr.bf16.mxu0 0
    %352 = vmatpush1.bf16.msra.mxu0 %v266
    %353 = vmatprep.subr.bf16.mxu0 0
    %354 = vmatpush1.bf16.msra.mxu0 %v267
    %355 = vmatprep.subr.bf16.mxu0 0
    %356 = vmatpush1.bf16.msra.mxu0 %v268
    %357 = vmatprep.subr.bf16.mxu0 0
    %358 = vmatpush1.bf16.msra.mxu0 %v269
    %359 = vmatprep.subr.bf16.mxu0 0
    %360 = vmatpush1.bf16.msra.mxu0 0
    %361 = vmatprep.subr.bf16.mxu0 0
    %362 = vmatpush1.bf16.msra.mxu0 0
    %363 = vmatprep.subr.bf16.mxu0 0
    %364 = vmatpush1.bf16.msra.mxu0 0
    %365 = vmatprep.subr.bf16.mxu0 0
    %366 = vmatpush1.bf16.msra.mxu0 0
    %367 = vmatprep.subr.bf16.mxu0 0
    %368 = vmatpush1.bf16.msra.mxu0 0
    %369 = vmatprep.subr.bf16.mxu0 0
    %370 = vmatpush1.bf16.msra.mxu0 0
    %371 = vmatprep.subr.bf16.mxu0 0
    %372 = vmatpush1.bf16.msra.mxu0 0
    %373 = vmatprep.subr.bf16.mxu0 0
    %374 = vmatpush1.bf16.msra.mxu0 0
    %375 = vmatprep.mubr.bf16.mxu0 0
    %376 = vmatmul.mubr.bf16.gmra.mrb[0].mxu0 %v91
    %v377 = vpop.f32.mrb[0].mxu0
    %v378 = vadd.f32 %v329, %v377
    %v379 = vpop.f32.mrb[0].mxu0
    %v380 = vpop.f32.mrb[0].mxu0
    %v381 = vadd.f32 %v332, %v380
    %v382 = vpop.f32.mrb[0].mxu0
    %383 = vmatprep.mubr.bf16.mxu0 0
    %384 = vmatmul.mubr.bf16.gmra.mrb[0].mxu0 %v94
    %v385 = vpop.f32.mrb[0].mxu0
    %v386 = vadd.f32 %v337, %v385
    %v387 = vpop.f32.mrb[0].mxu0
    %v388 = vpop.f32.mrb[0].mxu0
    %v389 = vadd.f32 %v340, %v388
    %v390 = vpop.f32.mrb[0].mxu0
    %391 = vdwg.mxu0
    %v392 = vmax.f32 %v378, 0.0
    %v393 = vmax.f32 %v381, 0.0
    %v394 = vmax.f32 %v386, 0.0
    %v395 = vmax.f32 %v389, 0.0
    %vm396 = vcmask 1040384
    %vm397 = vsmask.f32 256
    %vm398 = vmand %vm396, %vm397
    %v399 = vld [vmem:[#allocation3] sm:$0x1]
    %v400 = vsel %vm398, 0, %v399
    %401 = vst [vmem:[#allocation3] sm:$0x1] %v400
    %v402 = vld [vmem:[#allocation3 + $0xc] sm:$0x1]
    %v403 = vsel %vm398, 0, %v402
    %404 = vst [vmem:[#allocation3 + $0xc] sm:$0x1] %v403
    %vm405 = vsmask.f32 7938
    %vm406 = vmand %vm396, %vm405
    %v407 = vld [vmem:[#allocation3 + $0x8] sm:$0x1]
    %v408 = vsel %vm406, 0, %v407
    %409 = vst [vmem:[#allocation3 + $0x8] sm:$0x1] %v408
    %v410 = vld [vmem:[#allocation3 + $0x14] sm:$0x1]
    %v411 = vsel %vm406, 0, %v410
    %412 = vst [vmem:[#allocation3 + $0x14] sm:$0x1] %v411
    %v413 = vpack.c.bf16 %v393, %v392
    %v414 = vpack.c.bf16 %v395, %v394
    %v417 = vunpack.c.l.b16 %v413
    %v418 = vunpack.c.h.b16 %v413
    %v419 = vunpack.c.l.b16 %v414
    %v420 = vunpack.c.h.b16 %v414
    %v421 = vpack.c.b16 %v417, %v417
    %v422 = vpack.c.b16 %v418, %v418
    %v423 = vpack.c.b16 %v419, %v419
    %v424 = vpack.c.b16 %v420, %v420
    %vm425 = vsmask.f32 4368
    %vm426 = vmor %vm397, %vm425
    %v428 = vshrl.u32 %v421, 16
    %v430 = vrot.slane %v428, 7
    %v431 = vshll.u32 %v421, 16
    %v433 = vor.u32 %v430, %v431
    %v434 = vrot.slane %v430, 4
    %v436 = vshrl.u32 %v422, 16
    %v438 = vrot.slane %v436, 7
    %v439 = vshll.u32 %v422, 16
    %v441 = vor.u32 %v438, %v439
    %v442 = vsel %vm426, %v434, %v441
    %v443 = vrot.slane %v438, 4
    %v445 = vshrl.u32 %v423, 16
    %v447 = vrot.slane %v445, 7
    %v448 = vshll.u32 %v423, 16
    %v450 = vor.u32 %v447, %v448
    %v451 = vrot.slane %v447, 4
    %v453 = vshrl.u32 %v424, 16
    %v455 = vrot.slane %v453, 7
    %v456 = vshll.u32 %v424, 16
    %v458 = vor.u32 %v455, %v456
    %v459 = vsel %vm426, %v451, %v458
    %v460 = vrot.slane %v455, 4
    %vm467 = vcmask 1043456
    %vm468 = vmand %vm467, %vm405
    %v469 = vld [vmem:[#allocation3] sm:$0xf]
    %v470 = vsel %vm468, %v433, %v469
    %471 = vst [vmem:[#allocation3] sm:$0xf] %v470
    %472 = vst [vmem:[#allocation3 + $0x4] sm:$0xf] %v442
    %v473 = vld [vmem:[#allocation3 + $0x8] sm:$0x1]
    %v474 = vsel %vm398, %v443, %v473
    %475 = vst [vmem:[#allocation3 + $0x8] sm:$0x1] %v474
    %v476 = vld [vmem:[#allocation3 + $0xc] sm:$0xf]
    %v477 = vsel %vm468, %v450, %v476
    %478 = vst [vmem:[#allocation3 + $0xc] sm:$0xf] %v477
    %479 = vst [vmem:[#allocation3 + $0x10] sm:$0xf] %v459
    %v480 = vld [vmem:[#allocation3 + $0x14] sm:$0x1]
    %v481 = vsel %vm398, %v460, %v480
    %482 = vst [vmem:[#allocation3 + $0x14] sm:$0x1] %v481
    %v483 = vld [vmem:[#allocation3] sm:$0xf]
    %v484 = vld [vmem:[#allocation3 + $0x4] sm:$0xf]
    %v485 = vld [vmem:[#allocation3 + $0xc] sm:$0xf]
    %v486 = vld [vmem:[#allocation3 + $0x10] sm:$0xf]
    %v487 = vld [vmem:[#allocation3 + $0x8] sm:$0x1]
    %v488 = vld [vmem:[#allocation3 + $0x14] sm:$0x1]
    %v489 = vld [vmem:[#allocation3] sm:$0xe]
    %v490 = vld [vmem:[#allocation3 + $0xc] sm:$0xe]
    %v495 = vunpack.c.l.b16 %v483
    %v496 = vunpack.c.l.b16 %v484
    %v497 = vunpack.c.l.b16 %v485
    %v498 = vunpack.c.l.b16 %v486
    %v499 = vpack.c.b16 %v496, %v495
    %v500 = vpack.c.b16 %v498, %v497
    %v505 = vunpack.c.l.b16 %v487
    %v506 = vunpack.c.l.b16 %v488
    %v507 = vpack.c.b16 %v505, %v505
    %v508 = vpack.c.b16 %v506, %v506
    %vm509 = vsmask.f32 7424
    %v511 = vshrl.u32 %v499, 16
    %v513 = vshll.u32 %v499, 16
    %v515 = vrot.slane %v513, 1
    %v516 = vor.u32 %v511, %v515
    %v518 = vshll.u32 %v507, 16
    %v520 = vrot.slane %v518, 1
    %v521 = vsel %vm509, %v516, %v520
    %v523 = vshrl.u32 %v500, 16
    %v525 = vshll.u32 %v500, 16
    %v527 = vrot.slane %v525, 1
    %v528 = vor.u32 %v523, %v527
    %v530 = vshll.u32 %v508, 16
    %v532 = vrot.slane %v530, 1
    %v533 = vsel %vm509, %v528, %v532
    %v538 = vunpack.c.l.b16 %v489
    %v539 = vunpack.c.l.b16 %v490
    %v540 = vpack.c.b16 %v496, %v538
    %v541 = vpack.c.b16 %v498, %v539
    %vm542 = vcmask 1046528
    %v543 = vrot.slane %v540, 1
    %v544 = vrot.slane %v507, 1
    %v545 = vsel %vm542, %v543, %v544
    %v546 = vrot.slane %v541, 1
    %v547 = vrot.slane %v508, 1
    %v548 = vsel %vm542, %v546, %v547
    %v551 = vld [vmem:[#allocation9] sm:$0xf]
    %v552 = vld [vmem:[#allocation9 + $0x4] sm:$0xf]
    %v553 = vld [vmem:[#allocation9 + $0x8] sm:$0xf]
    %v554 = vld [vmem:[#allocation9 + $0xc] sm:$0xf]
    %v555 = vld [vmem:[#allocation9 + $0x10] sm:$0xf]
    %v556 = vld [vmem:[#allocation9 + $0x14] sm:$0xf]
    %v557 = vld [vmem:[#allocation9 + $0x18] sm:$0xf]
    %v558 = vld [vmem:[#allocation9 + $0x1c] sm:$0xf]
    %v559 = vld [vmem:[#allocation9 + $0x20] sm:$0xf]
    %v560 = vld [vmem:[#allocation9 + $0x24] sm:$0xf]
    %v561 = vld [vmem:[#allocation9 + $0x28] sm:$0xf]
    %v562 = vld [vmem:[#allocation9 + $0x2c] sm:$0xf]
    %v563 = vld [vmem:[#allocation9 + $0x30] sm:$0xf]
    %v564 = vld [vmem:[#allocation9 + $0x34] sm:$0xf]
    %v565 = vld [vmem:[#allocation9 + $0x38] sm:$0xf]
    %v566 = vld [vmem:[#allocation9 + $0x3c] sm:$0xf]
    %v567 = vld [vmem:[#allocation9 + $0x40] sm:$0xf]
    %v568 = vld [vmem:[#allocation9 + $0x44] sm:$0xf]
    %v569 = vld [vmem:[#allocation9 + $0x48] sm:$0xf]
    %v570 = vld [vmem:[#allocation9 + $0x4c] sm:$0xf]
    %v571 = vld [vmem:[#allocation9 + $0x50] sm:$0xf]
    %v572 = vld [vmem:[#allocation9 + $0x54] sm:$0xf]
    %v573 = vld [vmem:[#allocation9 + $0x58] sm:$0xf]
    %v574 = vld [vmem:[#allocation9 + $0x5c] sm:$0xf]
    %v575 = vld [vmem:[#allocation9 + $0x60] sm:$0xf]
    %v576 = vld [vmem:[#allocation9 + $0x64] sm:$0xf]
    %v577 = vld [vmem:[#allocation9 + $0x68] sm:$0xf]
    %v578 = vld [vmem:[#allocation9 + $0x6c] sm:$0xf]
    %v579 = vld [vmem:[#allocation9 + $0x70] sm:$0xf]
    %v580 = vld [vmem:[#allocation9 + $0x74] sm:$0xf]
    %v581 = vld [vmem:[#allocation9 + $0x78] sm:$0xf]
    %v582 = vld [vmem:[#allocation9 + $0x7c] sm:$0xf]
    %v583 = vld [vmem:[#allocation9 + $0x80] sm:$0xf]
    %v584 = vld [vmem:[#allocation9 + $0x84] sm:$0xf]
    %v585 = vld [vmem:[#allocation9 + $0x88] sm:$0xf]
    %v586 = vld [vmem:[#allocation9 + $0x8c] sm:$0xf]
    %v587 = vld [vmem:[#allocation9 + $0x90] sm:$0xf]
    %v588 = vld [vmem:[#allocation9 + $0x94] sm:$0xf]
    %v589 = vld [vmem:[#allocation9 + $0x98] sm:$0xf]
    %v590 = vld [vmem:[#allocation9 + $0x9c] sm:$0xf]
    %v591 = vld [vmem:[#allocation9 + $0xa0] sm:$0xf]
    %v592 = vld [vmem:[#allocation9 + $0xa4] sm:$0xf]
    %v593 = vld [vmem:[#allocation9 + $0xa8] sm:$0xf]
    %v594 = vld [vmem:[#allocation9 + $0xac] sm:$0xf]
    %v595 = vld [vmem:[#allocation9 + $0xb0] sm:$0xf]
    %v596 = vld [vmem:[#allocation9 + $0xb4] sm:$0xf]
    %v597 = vld [vmem:[#allocation9 + $0xb8] sm:$0xf]
    %v598 = vld [vmem:[#allocation9 + $0xbc] sm:$0xf]
    %v599 = vld [vmem:[#allocation9 + $0xc0] sm:$0xf]
    %v600 = vld [vmem:[#allocation9 + $0xc4] sm:$0xf]
    %v601 = vld [vmem:[#allocation9 + $0xc8] sm:$0xf]
    %v602 = vld [vmem:[#allocation9 + $0xcc] sm:$0xf]
    %v603 = vld [vmem:[#allocation9 + $0xd0] sm:$0xf]
    %v604 = vld [vmem:[#allocation9 + $0xd4] sm:$0xf]
    %v605 = vld [vmem:[#allocation9 + $0xd8] sm:$0xf]
    %v606 = vld [vmem:[#allocation9 + $0xdc] sm:$0xf]
    %v607 = vld [vmem:[#allocation9 + $0xe0] sm:$0xf]
    %v608 = vld [vmem:[#allocation9 + $0xe4] sm:$0xf]
    %v609 = vld [vmem:[#allocation9 + $0xe8] sm:$0xf]
    %v610 = vld [vmem:[#allocation9 + $0xec] sm:$0xf]
    %v611 = vld [vmem:[#allocation9 + $0xf0] sm:$0xf]
    %v612 = vld [vmem:[#allocation9 + $0xf4] sm:$0xf]
    %v613 = vld [vmem:[#allocation9 + $0xf8] sm:$0xf]
    %v614 = vld [vmem:[#allocation9 + $0xfc] sm:$0xf]
    %v615 = vld [vmem:[%s3 + $0x1] sm:$0x1]
    %v617 = vlaneseq
    %v618 = vshrl.u32 %v617, 7
    %v619 = vsub.s32 0, %v618
    %v620 = vrot.slane %v615, %v619
    %v686 = vunpack.c.l.b16 %v551
    %v687 = vunpack.c.l.b16 %v552
    %v688 = vunpack.c.l.b16 %v553
    %v689 = vunpack.c.l.b16 %v554
    %v690 = vunpack.c.l.b16 %v555
    %v691 = vunpack.c.l.b16 %v556
    %v692 = vunpack.c.l.b16 %v557
    %v693 = vunpack.c.l.b16 %v558
    %v694 = vunpack.c.l.b16 %v559
    %v695 = vunpack.c.l.b16 %v560
    %v696 = vunpack.c.l.b16 %v561
    %v697 = vunpack.c.l.b16 %v562
    %v698 = vunpack.c.l.b16 %v563
    %v699 = vunpack.c.l.b16 %v564
    %v700 = vunpack.c.l.b16 %v565
    %v701 = vunpack.c.l.b16 %v566
    %v702 = vunpack.c.l.b16 %v567
    %v703 = vunpack.c.l.b16 %v568
    %v704 = vunpack.c.l.b16 %v569
    %v705 = vunpack.c.l.b16 %v570
    %v706 = vunpack.c.l.b16 %v571
    %v707 = vunpack.c.l.b16 %v572
    %v708 = vunpack.c.l.b16 %v573
    %v709 = vunpack.c.l.b16 %v574
    %v710 = vunpack.c.l.b16 %v575
    %v711 = vunpack.c.l.b16 %v576
    %v712 = vunpack.c.l.b16 %v577
    %v713 = vunpack.c.l.b16 %v578
    %v714 = vunpack.c.l.b16 %v579
    %v715 = vunpack.c.l.b16 %v580
    %v716 = vunpack.c.l.b16 %v581
    %v717 = vunpack.c.l.b16 %v582
    %v718 = vunpack.c.l.b16 %v583
    %v719 = vunpack.c.l.b16 %v584
    %v720 = vunpack.c.l.b16 %v585
    %v721 = vunpack.c.l.b16 %v586
    %v722 = vunpack.c.l.b16 %v587
    %v723 = vunpack.c.l.b16 %v588
    %v724 = vunpack.c.l.b16 %v589
    %v725 = vunpack.c.l.b16 %v590
    %v726 = vunpack.c.l.b16 %v591
    %v727 = vunpack.c.l.b16 %v592
    %v728 = vunpack.c.l.b16 %v593
    %v729 = vunpack.c.l.b16 %v594
    %v730 = vunpack.c.l.b16 %v595
    %v731 = vunpack.c.l.b16 %v596
    %v732 = vunpack.c.l.b16 %v597
    %v733 = vunpack.c.l.b16 %v598
    %v734 = vunpack.c.l.b16 %v599
    %v735 = vunpack.c.l.b16 %v600
    %v736 = vunpack.c.l.b16 %v601
    %v737 = vunpack.c.l.b16 %v602
    %v738 = vunpack.c.l.b16 %v603
    %v739 = vunpack.c.l.b16 %v604
    %v740 = vunpack.c.l.b16 %v605
    %v741 = vunpack.c.l.b16 %v606
    %v742 = vunpack.c.l.b16 %v607
    %v743 = vunpack.c.l.b16 %v608
    %v744 = vunpack.c.l.b16 %v609
    %v745 = vunpack.c.l.b16 %v610
    %v746 = vunpack.c.l.b16 %v611
    %v747 = vunpack.c.l.b16 %v612
    %v748 = vunpack.c.l.b16 %v613
    %v749 = vunpack.c.l.b16 %v614
    %v750 = vpack.c.b16 %v687, %v686
    %v751 = vpack.c.b16 %v689, %v688
    %v752 = vpack.c.b16 %v691, %v690
    %v753 = vpack.c.b16 %v693, %v692
    %v754 = vpack.c.b16 %v695, %v694
    %v755 = vpack.c.b16 %v697, %v696
    %v756 = vpack.c.b16 %v699, %v698
    %v757 = vpack.c.b16 %v701, %v700
    %v758 = vpack.c.b16 %v703, %v702
    %v759 = vpack.c.b16 %v705, %v704
    %v760 = vpack.c.b16 %v707, %v706
    %v761 = vpack.c.b16 %v709, %v708
    %v762 = vpack.c.b16 %v711, %v710
    %v763 = vpack.c.b16 %v713, %v712
    %v764 = vpack.c.b16 %v715, %v714
    %v765 = vpack.c.b16 %v717, %v716
    %v766 = vpack.c.b16 %v719, %v718
    %v767 = vpack.c.b16 %v721, %v720
    %v768 = vpack.c.b16 %v723, %v722
    %v769 = vpack.c.b16 %v725, %v724
    %v770 = vpack.c.b16 %v727, %v726
    %v771 = vpack.c.b16 %v729, %v728
    %v772 = vpack.c.b16 %v731, %v730
    %v773 = vpack.c.b16 %v733, %v732
    %v774 = vpack.c.b16 %v735, %v734
    %v775 = vpack.c.b16 %v737, %v736
    %v776 = vpack.c.b16 %v739, %v738
    %v777 = vpack.c.b16 %v741, %v740
    %v778 = vpack.c.b16 %v743, %v742
    %v779 = vpack.c.b16 %v745, %v744
    %v780 = vpack.c.b16 %v747, %v746
    %v781 = vpack.c.b16 %v749, %v748
    %814 = vmatprep.subr.bf16.mxu0 0
    %815 = vmatpush1.bf16.msra.mxu0 %v750
    %816 = vmatprep.subr.bf16.mxu0 0
    %817 = vmatpush1.bf16.msra.mxu0 %v751
    %818 = vmatprep.subr.bf16.mxu0 0
    %819 = vmatpush1.bf16.msra.mxu0 %v752
    %820 = vmatprep.subr.bf16.mxu0 0
    %821 = vmatpush1.bf16.msra.mxu0 %v753
    %822 = vmatprep.subr.bf16.mxu0 0
    %823 = vmatpush1.bf16.msra.mxu0 %v754
    %824 = vmatprep.subr.bf16.mxu0 0
    %825 = vmatpush1.bf16.msra.mxu0 %v755
    %826 = vmatprep.subr.bf16.mxu0 0
    %827 = vmatpush1.bf16.msra.mxu0 %v756
    %828 = vmatprep.subr.bf16.mxu0 0
    %829 = vmatpush1.bf16.msra.mxu0 %v757
    %830 = vmatprep.subr.bf16.mxu0 0
    %831 = vmatpush1.bf16.msra.mxu0 %v758
    %832 = vmatprep.subr.bf16.mxu0 0
    %833 = vmatpush1.bf16.msra.mxu0 %v759
    %834 = vmatprep.subr.bf16.mxu0 0
    %835 = vmatpush1.bf16.msra.mxu0 %v760
    %836 = vmatprep.subr.bf16.mxu0 0
    %837 = vmatpush1.bf16.msra.mxu0 %v761
    %838 = vmatprep.subr.bf16.mxu0 0
    %839 = vmatpush1.bf16.msra.mxu0 %v762
    %840 = vmatprep.subr.bf16.mxu0 0
    %841 = vmatpush1.bf16.msra.mxu0 %v763
    %842 = vmatprep.subr.bf16.mxu0 0
    %843 = vmatpush1.bf16.msra.mxu0 %v764
    %844 = vmatprep.subr.bf16.mxu0 0
    %845 = vmatpush1.bf16.msra.mxu0 %v765
    %846 = vmatprep.mubr.bf16.mxu0 %v521
    %847 = vmatmul.mubr.bf16.gmra.mrb[0].mxu0 %v499
    %v848 = vpop.f32.mrb[0].mxu0
    %v849 = vadd.f32 %v620, %v848
    %v850 = vpop.f32.mrb[0].mxu0
    %v851 = vpop.f32.mrb[0].mxu0
    %v852 = vadd.f32 %v620, %v851
    %v853 = vpop.f32.mrb[0].mxu0
    %854 = vmatprep.mubr.bf16.mxu0 %v533
    %855 = vmatmul.mubr.bf16.gmra.mrb[0].mxu0 %v500
    %v856 = vpop.f32.mrb[0].mxu0
    %v857 = vadd.f32 %v620, %v856
    %v858 = vpop.f32.mrb[0].mxu0
    %v859 = vpop.f32.mrb[0].mxu0
    %v860 = vadd.f32 %v620, %v859
    %v861 = vpop.f32.mrb[0].mxu0
    %862 = vdwg.mxu0
    %863 = vmatprep.subr.bf16.mxu0 0
    %864 = vmatpush1.bf16.msra.mxu0 %v766
    %865 = vmatprep.subr.bf16.mxu0 0
    %866 = vmatpush1.bf16.msra.mxu0 %v767
    %867 = vmatprep.subr.bf16.mxu0 0
    %868 = vmatpush1.bf16.msra.mxu0 %v768
    %869 = vmatprep.subr.bf16.mxu0 0
    %870 = vmatpush1.bf16.msra.mxu0 %v769
    %871 = vmatprep.subr.bf16.mxu0 0
    %872 = vmatpush1.bf16.msra.mxu0 %v770
    %873 = vmatprep.subr.bf16.mxu0 0
    %874 = vmatpush1.bf16.msra.mxu0 %v771
    %875 = vmatprep.subr.bf16.mxu0 0
    %876 = vmatpush1.bf16.msra.mxu0 %v772
    %877 = vmatprep.subr.bf16.mxu0 0
    %878 = vmatpush1.bf16.msra.mxu0 %v773
    %879 = vmatprep.subr.bf16.mxu0 0
    %880 = vmatpush1.bf16.msra.mxu0 %v774
    %881 = vmatprep.subr.bf16.mxu0 0
    %882 = vmatpush1.bf16.msra.mxu0 %v775
    %883 = vmatprep.subr.bf16.mxu0 0
    %884 = vmatpush1.bf16.msra.mxu0 %v776
    %885 = vmatprep.subr.bf16.mxu0 0
    %886 = vmatpush1.bf16.msra.mxu0 %v777
    %887 = vmatprep.subr.bf16.mxu0 0
    %888 = vmatpush1.bf16.msra.mxu0 %v778
    %889 = vmatprep.subr.bf16.mxu0 0
    %890 = vmatpush1.bf16.msra.mxu0 %v779
    %891 = vmatprep.subr.bf16.mxu0 0
    %892 = vmatpush1.bf16.msra.mxu0 %v780
    %893 = vmatprep.subr.bf16.mxu0 0
    %894 = vmatpush1.bf16.msra.mxu0 %v781
    %895 = vmatprep.mubr.bf16.mxu0 %v90
    %896 = vmatmul.mubr.bf16.gmra.mrb[0].mxu0 %v545
    %v897 = vpop.f32.mrb[0].mxu0
    %v898 = vadd.f32 %v849, %v897
    %v899 = vpop.f32.mrb[0].mxu0
    %v900 = vpop.f32.mrb[0].mxu0
    %v901 = vadd.f32 %v852, %v900
    %v902 = vpop.f32.mrb[0].mxu0
    %903 = vmatprep.mubr.bf16.mxu0 %v93
    %904 = vmatmul.mubr.bf16.gmra.mrb[0].mxu0 %v548
    %v905 = vpop.f32.mrb[0].mxu0
    %v906 = vadd.f32 %v857, %v905
    %v907 = vpop.f32.mrb[0].mxu0
    %v908 = vpop.f32.mrb[0].mxu0
    %v909 = vadd.f32 %v860, %v908
    %v910 = vpop.f32.mrb[0].mxu0
    %911 = vdwg.mxu0
    %v912 = vmax.f32 %v898, 0.0
    %v913 = vmax.f32 %v901, 0.0
    %v914 = vmax.f32 %v906, 0.0
    %v915 = vmax.f32 %v909, 0.0
    %916 = vst [vmem:[#allocation10] sm:$0xff] %v912
    %917 = vst [vmem:[#allocation10 + $0x8] sm:$0xff] %v913
    %918 = vst [vmem:[#allocation10 + $0x10] sm:$0xff] %v914
    %919 = vst [vmem:[#allocation10 + $0x18] sm:$0xff] %v915
    // Predicated region
    $region30: #{tpu_custom_call.1} parent=1 // pred_check
      _
    $region31: #{tpu_custom_call.1} parent=1 // pred_check_branch
      %921 = sbr.rel (0) target = $region33
    $region32: #{tpu_custom_call.1} parent=1 // pred_region
      %s923 = ssub.s32 512, 512
      %924 = vsyncadd [#allocation6], %s923
      %s925 = sshll.u32 [#allocation10], 4
      %s926 = int_to_ptr.vmem [resolvable:$true] %s925
      %931 = dma.vmem_to_hbm [thread:$0]  %s926, 512, %s4, [#allocation6], 128, 128, 8
    $region33: #{tpu_custom_call.1} parent=1 // pred_fallthru
      _
    // Predicated region
    $region34: #{tpu_custom_call.1} parent=1 // pred_check
      _
    $region35: #{tpu_custom_call.1} parent=1 // pred_check_branch
      %933 = sbr.rel (0) target = $region37
    $region36: #{tpu_custom_call.1} parent=1 // pred_region
      %934 = dma.done [#allocation6], 512
    $region37: #{tpu_custom_call.1} parent=1 // pred_fallthru
      _
    %935 = vsyncpa [#allocation5], 1
    %936 = vsyncpa [#allocation8], 1
    %937 = vsyncpa [#allocation6], 1

</llo_original>
